<compile_context>
chip_gen: v5e
topology: v5e:2x2
jax: 0.10.0
libtpu: 0.0.40
codegen_flags: <defaults>
</compile_context>

<pallas_src>
import functools

import jax
import jax.numpy as jnp
from jax import lax
from jax.experimental import pallas as pl
from jax.experimental.pallas import tpu as pltpu


def _round_up(x, m):
    return ((x + m - 1) // m) * m


def _round_down(x, m):
    return (x // m) * m


_MIN_GRID_STEPS = 8          # keep both v7x TCs busy + pipeline depth
_LANE_PATH_MIN_C = 64        # channels_last: direct lane-reduction path threshold


def _vmem_budget():
    """Generation-aware (target_block_bytes, vmem_limit_bytes)."""
    vmem = None
    try:
        info = pltpu.get_tpu_info()
        vmem = getattr(info, "vmem_capacity_bytes", None)
    except Exception:
        vmem = None
    if vmem is None:
        vmem = 64 * 1024 * 1024  # conservative: assume v7x-sized VMEM
    if vmem >= 100 * 1024 * 1024:
        # v5e / v6e: 128 MiB physical VMEM -> bigger blocks, higher scoped limit.
        return 2 * 1024 * 1024, 64 * 1024 * 1024
    # v7x: 64 MiB physical -> ~1.5 MiB blocks, <= 48 MiB scoped limit
    # (leaves headroom for double-buffered in/out + the f32 temporaries Mosaic
    #  materializes for the cast / centered / fused-affine expressions).
    return (3 * 1024 * 1024) // 2, 48 * 1024 * 1024


# ---------------------- sublane-reduction kernel (C on sublanes) ------------ #
def _ln_sublane_kernel(x_ref, w_ref, b_ref, o_ref, *, eps, inv_c):
    # x/o: (1, C, T); w/b: (1, C, 1).  Normalize over C (sublanes) per lane col.
    x = x_ref[...].astype(jnp.float32)
    mean = jnp.sum(x, axis=1, keepdims=True) * inv_c          # (1, 1, T)
    xc = x - mean                                             # reused below
    var = jnp.sum(xc * xc, axis=1, keepdims=True) * inv_c     # (1, 1, T)
    inv = lax.rsqrt(var + eps)                                # (1, 1, T)
    w = w_ref[...].astype(jnp.float32)                        # (1, C, 1) lane-splat
    b = b_ref[...].astype(jnp.float32)
    o_ref[...] = (xc * inv * w + b).astype(o_ref.dtype)


def _ln_over_c_sublane(x3, weight, bias, eps):
    """x3: (B, C, L) -> (B, C, L), normalized over C independently per (b, l)."""
    B, C, L = x3.shape
    target_bytes, vmem_limit = _vmem_budget()

    itemsize = jnp.dtype(x3.dtype).itemsize
    sub_pack = 8 * max(1, 4 // itemsize)        # sublane padding granularity
    c_pad = _round_up(C, sub_pack)
    bytes_per_lane = max(1, c_pad * itemsize)

    # Lane tile: sized by bytes, multiple of 128, no bigger than needed.
    T = _round_down(max(target_bytes // bytes_per_lane, 128), 128)
    T = max(128, min(T, _round_up(L, 128)))
    # Keep >= _MIN_GRID_STEPS grid steps (v7x dual-TC occupancy + pipelining).
    while T > 128 and B * pl.cdiv(L, T) < _MIN_GRID_STEPS:
        T = max(128, _round_down(T // 2, 128))

    w3 = weight.astype(jnp.float32).reshape(1, C, 1)
    b3 = bias.astype(jnp.float32).reshape(1, C, 1)

    kernel = functools.partial(_ln_sublane_kernel, eps=eps, inv_c=1.0 / C)
    return pl.pallas_call(
        kernel,
        out_shape=jax.ShapeDtypeStruct((B, C, L), x3.dtype),
        grid_spec=pltpu.PrefetchScalarGridSpec(
            num_scalar_prefetch=0,
            grid=(B, pl.cdiv(L, T)),
            in_specs=[
                pl.BlockSpec((1, C, T), lambda b, j: (b, 0, j)),
                pl.BlockSpec((1, C, 1), lambda b, j: (0, 0, 0)),
                pl.BlockSpec((1, C, 1), lambda b, j: (0, 0, 0)),
            ],
            out_specs=pl.BlockSpec((1, C, T), lambda b, j: (b, 0, j)),
        ),
        compiler_params=pltpu.CompilerParams(
            dimension_semantics=("parallel", "parallel"),
            vmem_limit_bytes=vmem_limit,
        ),
    )(x3, w3, b3)


# ------------------------ lane-reduction kernel (C on lanes) ---------------- #
def _ln_lane_kernel(x_ref, w_ref, b_ref, o_ref, *, eps, inv_c):
    # x/o: (TR, C); w/b: (1, C).  Normalize over the last (lane) axis.
    x = x_ref[...].astype(jnp.float32)
    mean = jnp.sum(x, axis=-1, keepdims=True) * inv_c
    xc = x - mean
    var = jnp.sum(xc * xc, axis=-1, keepdims=True) * inv_c
    inv = lax.rsqrt(var + eps)
    w = w_ref[...].astype(jnp.float32)
    b = b_ref[...].astype(jnp.float32)
    o_ref[...] = (xc * inv * w + b).astype(o_ref.dtype)


def _ln_over_c_lane(x2, weight, bias, eps):
    """x2: (R, C) -> (R, C), normalized over the last axis."""
    R, C = x2.shape
    target_bytes, vmem_limit = _vmem_budget()

    itemsize = jnp.dtype(x2.dtype).itemsize
    bytes_per_row = max(1, _round_up(C, 128) * itemsize)

    # Row tile: sized by bytes, multiple of 8, no bigger than needed.
    TR = _round_down(max(target_bytes // bytes_per_row, 8), 8)
    TR = max(8, min(TR, _round_up(R, 8)))
    while TR > 8 and pl.cdiv(R, TR) < _MIN_GRID_STEPS:
        TR = max(8, _round_down(TR // 2, 8))

    kernel = functools.partial(_ln_lane_kernel, eps=eps, inv_c=1.0 / C)
    return pl.pallas_call(
        kernel,
        out_shape=jax.ShapeDtypeStruct((R, C), x2.dtype),
        grid_spec=pltpu.PrefetchScalarGridSpec(
            num_scalar_prefetch=0,
            grid=(pl.cdiv(R, TR),),
            in_specs=[
                pl.BlockSpec((TR, C), lambda i: (i, 0)),
                pl.BlockSpec((1, C), lambda i: (0, 0)),
                pl.BlockSpec((1, C), lambda i: (0, 0)),
            ],
            out_specs=pl.BlockSpec((TR, C), lambda i: (i, 0)),
        ),
        compiler_params=pltpu.CompilerParams(
            dimension_semantics=("parallel",),
            vmem_limit_bytes=vmem_limit,
        ),
    )(x2, weight.astype(jnp.float32).reshape(1, C),
      bias.astype(jnp.float32).reshape(1, C))


# ------------------------------- public wrappers ---------------------------- #
def layer_norm_channels_first(x, weight, bias, eps=1e-6):
    """x: (B, C, H, W) -> (B, C, H, W), normalized over C per spatial location."""
    B, C, H, W = x.shape
    out = _ln_over_c_sublane(x.reshape(B, C, H * W), weight, bias, eps)
    return out.reshape(B, C, H, W)


def layer_norm_channels_last(x, weight, bias, eps=1e-6):
    """x: (..., C) -> (..., C), normalized over the last (channel) axis."""
    orig_shape = x.shape
    C = orig_shape[-1]
    x2 = x.reshape(-1, C)

    if C >= _LANE_PATH_MIN_C:
        # Moderate/large C: one contiguous HBM pass, rows on sublanes, C on lanes.
        out2 = _ln_over_c_lane(x2, weight, bias, eps)
    else:
        # Tiny C: rows -> lanes, C -> sublanes (lane-dense stores, sublane reduce).
        # TODO(synk): a per-block in-kernel transpose would remove the two
        # whole-tensor transposes for tiny C; kept simple here.
        x3 = jnp.transpose(x2)[None]                     # (1, C, R)
        out2 = jnp.transpose(_ln_over_c_sublane(x3, weight, bias, eps)[0])
    return out2.reshape(orig_shape)


# ----------------------------------- module --------------------------------- #
class LayerNormPallas:
    """Mirror of MWDIN.LayerNorm: weight=ones(C), bias=zeros(C)."""

    def __init__(self, normalized_shape, eps=1e-6, data_format="channels_first"):
        assert data_format in ("channels_last", "channels_first")
        self.weight = jnp.ones((normalized_shape,), jnp.float32)
        self.bias = jnp.zeros((normalized_shape,), jnp.float32)
        self.eps = eps
        self.data_format = data_format

    def __call__(self, x):
        if self.data_format == "channels_last":
            return layer_norm_channels_last(x, self.weight, self.bias, self.eps)
        return layer_norm_channels_first(x, self.weight, self.bias, self.eps)


# --------------------------------- references -------------------------------- #
def _ref_channels_first(x, w, b, eps):
    u = x.mean(1, keepdims=True)
    s = ((x - u) ** 2).mean(1, keepdims=True)
    xn = (x - u) / jnp.sqrt(s + eps)
    return w[None, :, None, None] * xn + b[None, :, None, None]


def _ref_channels_last(x, w, b, eps):
    u = x.mean(-1, keepdims=True)
    s = ((x - u) ** 2).mean(-1, keepdims=True)
    xn = (x - u) / jnp.sqrt(s + eps)
    return xn * w + b


if __name__ == "__main__":
    key = jax.random.PRNGKey(0)

    # ---- channels_first (module default), small shapes ---------------------
    B, C, H, W = 2, 4, 16, 16
    x_cf = jax.random.normal(key, (B, C, H, W), jnp.float32)
    ln_cf = LayerNormPallas(C, eps=1e-6, data_format="channels_first")
    ln_cf.weight = 1.0 + 0.1 * jnp.arange(C, dtype=jnp.float32)
    ln_cf.bias = 0.05 * jnp.arange(C, dtype=jnp.float32)
    y_cf = jax.block_until_ready(ln_cf(x_cf))
    y_cf_ref = _ref_channels_first(x_cf, ln_cf.weight, ln_cf.bias, 1e-6)
    assert y_cf.shape == x_cf.shape
    assert bool(jnp.all(jnp.isfinite(y_cf)))
    assert jnp.allclose(y_cf, y_cf_ref, atol=5e-5, rtol=1e-5)

    # ---- channels_first, ragged spatial size (cdiv edge block) --------------
    x_cf2 = jax.random.normal(jax.random.PRNGKey(2), (2, 4, 10, 13), jnp.float32)
    y_cf2 = jax.block_until_ready(
        layer_norm_channels_first(x_cf2, ln_cf.weight, ln_cf.bias, 1e-6))
    y_cf2_ref = _ref_channels_first(x_cf2, ln_cf.weight, ln_cf.bias, 1e-6)
    assert bool(jnp.all(jnp.isfinite(y_cf2)))
    assert jnp.allclose(y_cf2, y_cf2_ref, atol=5e-5, rtol=1e-5)

    # ---- channels_last, tiny C (sublane route) -------------------------------
    x_cl = jax.random.normal(jax.random.PRNGKey(1), (B, H, W, C), jnp.float32)
    ln_cl = LayerNormPallas(C, eps=1e-6, data_format="channels_last")
    ln_cl.weight = 1.0 + 0.1 * jnp.arange(C, dtype=jnp.float32)
    ln_cl.bias = 0.05 * jnp.arange(C, dtype=jnp.float32)
    y_cl = jax.block_until_ready(ln_cl(x_cl))
    y_cl_ref = _ref_channels_last(x_cl, ln_cl.weight, ln_cl.bias, 1e-6)
    assert y_cl.shape == x_cl.shape
    assert bool(jnp.all(jnp.isfinite(y_cl)))
    assert jnp.allclose(y_cl, y_cl_ref, atol=5e-5, rtol=1e-5)

    # ---- channels_last, moderate C (direct lane path), ragged row count -----
    C2 = 64
    x_cl2 = jax.random.normal(jax.random.PRNGKey(3), (2, 7, 9, C2), jnp.float32)
    w2 = 1.0 + 0.01 * jnp.arange(C2, dtype=jnp.float32)
    b2 = 0.02 * jnp.arange(C2, dtype=jnp.float32)
    y_cl2 = jax.block_until_ready(layer_norm_channels_last(x_cl2, w2, b2, 1e-6))
    y_cl2_ref = _ref_channels_last(x_cl2, w2, b2, 1e-6)
    assert y_cl2.shape == x_cl2.shape
    assert bool(jnp.all(jnp.isfinite(y_cl2)))
    assert jnp.allclose(y_cl2, y_cl2_ref, atol=5e-5, rtol=1e-5)

    print("KERNEL_OK")
</pallas_src>

<mosaic_0001>
module attributes {stable_mosaic.version = 11 : i64} {
  func.func @_ln_sublane_kernel(%arg0: i32, %arg1: i32, %arg2: memref<1x4x128xf32, #tpu.memory_space<vmem>>, %arg3: memref<1x4x1xf32, #tpu.memory_space<vmem>>, %arg4: memref<1x4x1xf32, #tpu.memory_space<vmem>>, %arg5: memref<1x4x128xf32, #tpu.memory_space<vmem>>) attributes {dimension_semantics = [#tpu.dimension_semantics<parallel>, #tpu.dimension_semantics<parallel>], iteration_bounds = array<i64: 2, 2>, scalar_prefetch = 0 : i64, scratch_operands = 0 : i64, tpu.core_type = #tpu.core_type<tc>, window_params = [{transform_indices = @transform_0, window_bounds = array<i64: 1, 4, 128>}, {pipeline_mode = #tpu.pipeline_mode<synchronous>, transform_indices = @transform_1, window_bounds = array<i64: 1, 4, 1>}, {pipeline_mode = #tpu.pipeline_mode<synchronous>, transform_indices = @transform_2, window_bounds = array<i64: 1, 4, 1>}, {transform_indices = @transform_3, window_bounds = array<i64: 1, 4, 128>}]} {
    %c0 = arith.constant 0 : index
    %c0_0 = arith.constant 0 : index
    %c0_1 = arith.constant 0 : index
    %0 = vector.load %arg2[%c0, %c0_0, %c0_1] : memref<1x4x128xf32, #tpu.memory_space<vmem>>, vector<1x4x128xf32>
    %cst = arith.constant dense<0.000000e+00> : vector<1x128xf32>
    %1 = vector.multi_reduction <add>, %0, %cst [1] : vector<1x4x128xf32> to vector<1x128xf32>
    %2 = vector.shape_cast %1 : vector<1x128xf32> to vector<1x1x128xf32>
    %cst_2 = arith.constant 2.500000e-01 : f32
    %3 = vector.broadcast %cst_2 : f32 to vector<1x1x128xf32>
    %4 = arith.mulf %2, %3 : vector<1x1x128xf32>
    %5 = vector.broadcast %4 : vector<1x1x128xf32> to vector<1x4x128xf32>
    %6 = arith.subf %0, %5 : vector<1x4x128xf32>
    %7 = arith.mulf %6, %6 : vector<1x4x128xf32>
    %cst_3 = arith.constant dense<0.000000e+00> : vector<1x128xf32>
    %8 = vector.multi_reduction <add>, %7, %cst_3 [1] : vector<1x4x128xf32> to vector<1x128xf32>
    %9 = vector.shape_cast %8 : vector<1x128xf32> to vector<1x1x128xf32>
    %cst_4 = arith.constant 2.500000e-01 : f32
    %10 = vector.broadcast %cst_4 : f32 to vector<1x1x128xf32>
    %11 = arith.mulf %9, %10 : vector<1x1x128xf32>
    %cst_5 = arith.constant 9.99999997E-7 : f32
    %12 = vector.broadcast %cst_5 : f32 to vector<1x1x128xf32>
    %13 = arith.addf %11, %12 : vector<1x1x128xf32>
    %14 = math.rsqrt %13 : vector<1x1x128xf32>
    %c0_6 = arith.constant 0 : index
    %c0_7 = arith.constant 0 : index
    %c0_8 = arith.constant 0 : index
    %15 = vector.load %arg3[%c0_6, %c0_7, %c0_8] : memref<1x4x1xf32, #tpu.memory_space<vmem>>, vector<1x4x1xf32>
    %c0_9 = arith.constant 0 : index
    %c0_10 = arith.constant 0 : index
    %c0_11 = arith.constant 0 : index
    %16 = vector.load %arg4[%c0_9, %c0_10, %c0_11] : memref<1x4x1xf32, #tpu.memory_space<vmem>>, vector<1x4x1xf32>
    %17 = vector.broadcast %14 : vector<1x1x128xf32> to vector<1x4x128xf32>
    %18 = arith.mulf %6, %17 : vector<1x4x128xf32>
    %19 = vector.broadcast %15 : vector<1x4x1xf32> to vector<1x4x128xf32>
    %20 = arith.mulf %18, %19 : vector<1x4x128xf32>
    %21 = vector.broadcast %16 : vector<1x4x1xf32> to vector<1x4x128xf32>
    %22 = arith.addf %20, %21 : vector<1x4x128xf32>
    %c0_12 = arith.constant 0 : index
    %c0_13 = arith.constant 0 : index
    %c0_14 = arith.constant 0 : index
    %23 = vector.load %arg5[%c0_12, %c0_13, %c0_14] : memref<1x4x128xf32, #tpu.memory_space<vmem>>, vector<1x4x128xf32>
    tpu.vector_store %arg5[%c0_12, %c0_13, %c0_14], %22 {strides = array<i32>} : memref<1x4x128xf32, #tpu.memory_space<vmem>>, vector<1x4x128xf32>,
    return
  }
  func.func @transform_0(%arg0: i32, %arg1: i32) -> (i32, i32, i32) {
    %c0_i32 = arith.constant 0 : i32
    %c0_i32_0 = arith.constant 0 : i32
    return %arg0, %c0_i32, %arg1 : i32, i32, i32
  }
  func.func @transform_1(%arg0: i32, %arg1: i32) -> (i32, i32, i32) {
    %c0_i32 = arith.constant 0 : i32
    %c0_i32_0 = arith.constant 0 : i32
    %c0_i32_1 = arith.constant 0 : i32
    %c0_i32_2 = arith.constant 0 : i32
    return %c0_i32, %c0_i32_0, %c0_i32_1 : i32, i32, i32
  }
  func.func @transform_2(%arg0: i32, %arg1: i32) -> (i32, i32, i32) {
    %c0_i32 = arith.constant 0 : i32
    %c0_i32_0 = arith.constant 0 : i32
    %c0_i32_1 = arith.constant 0 : i32
    %c0_i32_2 = arith.constant 0 : i32
    return %c0_i32, %c0_i32_0, %c0_i32_1 : i32, i32, i32
  }
  func.func @transform_3(%arg0: i32, %arg1: i32) -> (i32, i32, i32) {
    %c0_i32 = arith.constant 0 : i32
    %c0_i32_0 = arith.constant 0 : i32
    return %arg0, %c0_i32, %arg1 : i32, i32, i32
  }
}

</mosaic_0001>

<llo_original>
// kernel: tpu_custom_call.1
$region0: #{tpu_custom_call.1}
  #allocation0 [shape = 'u32[]', space=smem, size = 0x4, offset = 0x4, fixed_abs, tag = 'smem constant byte address 0x4 - core index']
  #allocation1 [shape = 'u32[72,128]{1,0:T(1,128)}', space=vmem, size = 0x9000, scoped, tag = 'internal scratch']
  %s0 = inlined_call_operand.hbm [shape: f32[2,4,256], index: 0, kind: input, shape index: {}]
  %s1 = inlined_call_operand.vmem [shape: f32[1,4,1], index: 1, kind: input, shape index: {}]
  %s2 = inlined_call_operand.vmem [shape: f32[1,4,1], index: 2, kind: input, shape index: {}]
  %s3 = inlined_call_operand.hbm [shape: f32[2,4,256], index: 3, kind: output, shape index: {}]
  %s4 = sld [smem:[#allocation0]]
  $region49: #{tpu_custom_call.1} parent=0
    _
  %s6 = ssub.s32 1, %s4
  %s7 = scalar_select 0, %s6, %s4
  $region1: #{tpu_custom_call.1} parent=0
    #allocation2 [shape = 'u8[4096]{0}', space=vmem, size = 0x1000, scoped, tag = 'input window, operand 0']
    #allocation3 [shape = 's32[2]{0}', space=sflag, size = 0x8, scoped, tag = 'scoped memory for tpu_custom_call.1']
    #allocation4 [shape = 's32[2]{0}', space=sflag, size = 0x8, scoped, tag = 'scoped memory for tpu_custom_call.1']
    #allocation5 [shape = 'u8[4096]{0}', space=vmem, size = 0x1000, scoped, tag = 'output window, operand 0']
    %8 = vsyncpa [#allocation3], 0
    %s9 = scalar_lea.sflag [#allocation3], 1
    %10 = vsyncpa %s9, 0
    %11 = vsyncpa [#allocation4], 0
    %s12 = scalar_lea.sflag [#allocation4], 1
    %13 = vsyncpa %s12, 0
    loop: start=0, step=1, limit=6
    $region2: #{tpu_custom_call.1} parent=1 // loop_pre_header
      _
    $region3: #{tpu_custom_call.1} parent=1 // loop_header
      %s15 = sphi 0, %s19
      %p16 = scmp.ge.s32.totalorder %s15, 6
      %s22 = sphi 0, %s34
      %s23 = sphi 0, %s30
      %s24 = sphi 0, %s22
      %s25 = sphi 0, %s23
      %s26 = sphi 0, %s24
      %s27 = sphi 0, %s25
      %s39 = sphi 0, %s41
      %s42 = sphi 0, %s39
      %s43 = sphi 0, %s42
      %s59 = sphi 0, %s43
      %s63 = sphi 0, %s63
      %s65 = sphi 0, %s63
      %s66 = sphi 0, %s65
      %s80 = sphi 0, %s66
      %s84 = sphi 0, %s84
      %s86 = sphi 0, %s84
      %s87 = sphi 0, %s86
      %s101 = sphi 0, %s87
      %s109 = sphi 0, %s111
      %s112 = sphi 0, %s109
      %s113 = sphi 0, %s112
      %s129 = sphi 0, %s113
    $region4: #{tpu_custom_call.1} parent=1 // loop_header_branch
      %18 = sbr.rel (%p16) target = $region8
    $region5: #{tpu_custom_call.1} parent=1 // loop_body
      %s20 = ssub.s32 %s15, 1
      %s21 = ssub.s32 %s15, 2
      %s28 = sadd.s32 1, %s23
      %p29 = scmp.ge.s32.totalorder %s28, 2
      %s30 = scalar_select %p29, 0, %s28
      %s31 = sadd.s32 1, %s22
      %s32 = scalar_select %p29, %s31, %s22
      %p33 = scmp.ge.s32.totalorder %s32, 2
      %s34 = scalar_select %p33, 0, %s32
      %s35 = ssub.s32 %s22, %s34
      %s36 = ssub.s32 %s23, %s30
      %s37 = sor.u32 %s35, %s36
      %p38 = scmp.eq.s32.totalorder %s37, 0
      %s40 = sadd.s32 %s39, 1
      %s41 = scalar_select %p38, %s39, %s40
      %p44 = pneg %p38
      %p45 = scmp.eq.s32.totalorder %s15, 3
      %p46 = por %p44, %p45
      %p47 = scmp.ne.s32.totalorder %s39, %s42
      %p48 = scmp.eq.s32.totalorder %s15, 0
      %p49 = por %p47, %p48
      %p50 = scmp.ne.s32.totalorder %s39, %s42
      %p51 = scmp.eq.s32.totalorder %s20, 3
      %p52 = por %p50, %p51
      %p53 = scmp.ne.s32.totalorder %s42, %s43
      %p54 = scmp.eq.s32.totalorder %s20, 0
      %p55 = por %p53, %p54
      %p56 = scmp.ne.s32.totalorder %s42, %s43
      %p57 = scmp.eq.s32.totalorder %s21, 3
      %p58 = por %p56, %p57
      %p60 = scmp.ne.s32.totalorder %s43, %s59
      %p61 = scmp.eq.s32.totalorder %s21, 0
      %p62 = por %p60, %p61
      %s64 = sadd.s32 %s63, 1
      %p67 = scmp.eq.s32.totalorder %s15, 3
      %p68 = scmp.ne.s32.totalorder %s63, %s65
      %p69 = scmp.eq.s32.totalorder %s15, 0
      %p70 = por %p68, %p69
      %p71 = scmp.ne.s32.totalorder %s63, %s65
      %p72 = scmp.eq.s32.totalorder %s20, 3
      %p73 = por %p71, %p72
      %p74 = scmp.ne.s32.totalorder %s65, %s66
      %p75 = scmp.eq.s32.totalorder %s20, 0
      %p76 = por %p74, %p75
      %p77 = scmp.ne.s32.totalorder %s65, %s66
      %p78 = scmp.eq.s32.totalorder %s21, 3
      %p79 = por %p77, %p78
      %p81 = scmp.ne.s32.totalorder %s66, %s80
      %p82 = scmp.eq.s32.totalorder %s21, 0
      %p83 = por %p81, %p82
      %s85 = sadd.s32 %s84, 1
      %p88 = scmp.eq.s32.totalorder %s15, 3
      %p89 = scmp.ne.s32.totalorder %s84, %s86
      %p90 = scmp.eq.s32.totalorder %s15, 0
      %p91 = por %p89, %p90
      %p92 = scmp.ne.s32.totalorder %s84, %s86
      %p93 = scmp.eq.s32.totalorder %s20, 3
      %p94 = por %p92, %p93
      %p95 = scmp.ne.s32.totalorder %s86, %s87
      %p96 = scmp.eq.s32.totalorder %s20, 0
      %p97 = por %p95, %p96
      %p98 = scmp.ne.s32.totalorder %s86, %s87
      %p99 = scmp.eq.s32.totalorder %s21, 3
      %p100 = por %p98, %p99
      %p102 = scmp.ne.s32.totalorder %s87, %s101
      %p103 = scmp.eq.s32.totalorder %s21, 0
      %p104 = por %p102, %p103
      %s105 = ssub.s32 %s22, %s34
      %s106 = ssub.s32 %s23, %s30
      %s107 = sor.u32 %s105, %s106
      %p108 = scmp.eq.s32.totalorder %s107, 0
      %s110 = sadd.s32 %s109, 1
      %s111 = scalar_select %p108, %s109, %s110
      %p114 = pneg %p108
      %p115 = scmp.eq.s32.totalorder %s15, 3
      %p116 = por %p114, %p115
      %p117 = scmp.ne.s32.totalorder %s109, %s112
      %p118 = scmp.eq.s32.totalorder %s15, 0
      %p119 = por %p117, %p118
      %p120 = scmp.ne.s32.totalorder %s109, %s112
      %p121 = scmp.eq.s32.totalorder %s20, 3
      %p122 = por %p120, %p121
      %p123 = scmp.ne.s32.totalorder %s112, %s113
      %p124 = scmp.eq.s32.totalorder %s20, 0
      %p125 = por %p123, %p124
      %p126 = scmp.ne.s32.totalorder %s112, %s113
      %p127 = scmp.eq.s32.totalorder %s21, 3
      %p128 = por %p126, %p127
      %p130 = scmp.ne.s32.totalorder %s113, %s129
      %p131 = scmp.eq.s32.totalorder %s21, 0
      %p132 = por %p130, %p131
      %p133 = scmp.le.s32.totalorder 1, %s15
      %p134 = scmp.lt.s32.totalorder %s15, 5
      %p135 = pnand %p133, %p134
      %p136 = pneg %p135
      // Predicated region
      $region9: #{tpu_custom_call.1} parent=5 // pred_check
        _
      $region10: #{tpu_custom_call.1} parent=5 // pred_check_branch
        %138 = sbr.rel (%p135) target = $region12
      $region11: #{tpu_custom_call.1} parent=5 // pred_region
        %s139 = ssub.s32 %s15, 1
        // Predicated region
        $region13: #{tpu_custom_call.1} parent=11 // pred_check
          %p140 = pneg %p76
        $region14: #{tpu_custom_call.1} parent=11 // pred_check_branch
          %142 = sbr.rel (%p140) target = $region16
        $region15: #{tpu_custom_call.1} parent=11 // pred_region
          _
        $region16: #{tpu_custom_call.1} parent=11 // pred_fallthru
          _
        // Predicated region
        $region17: #{tpu_custom_call.1} parent=11 // pred_check
          %p143 = pneg %p97
        $region18: #{tpu_custom_call.1} parent=11 // pred_check_branch
          %145 = sbr.rel (%p143) target = $region20
        $region19: #{tpu_custom_call.1} parent=11 // pred_region
          _
        $region20: #{tpu_custom_call.1} parent=11 // pred_fallthru
          _
      $region12: #{tpu_custom_call.1} parent=5 // pred_fallthru
        _
      %p146 = scmp.lt.s32.totalorder %s15, 4
      // Predicated region
      $region21: #{tpu_custom_call.1} parent=5 // pred_check
        %p147 = pneg %p146
      $region22: #{tpu_custom_call.1} parent=5 // pred_check_branch
        %149 = sbr.rel (%p147) target = $region24
      $region23: #{tpu_custom_call.1} parent=5 // pred_region
        // Predicated region
        $region25: #{tpu_custom_call.1} parent=23 // pred_check
          %p150 = pneg %p49
        $region26: #{tpu_custom_call.1} parent=23 // pred_check_branch
          %152 = sbr.rel (%p150) target = $region28
        $region27: #{tpu_custom_call.1} parent=23 // pred_region
          %s153 = sand.u32 %s39, 1
          %s154 = scalar_lea.sflag [#allocation3], %s153
          %s155 = sand.u32 %s39, 1
          %s156 = smul.addr %s155, 4
          %s157 = scalar_lea.vmem [#allocation2], %s156
          %159 = vsyncadd %s154, 0
          %s160 = smul.addr %s22, 2
          %s161 = sadd.s32 %s23, %s160
          %s162 = smul.addr %s161, 4
          %s163 = scalar_lea.hbm %s0, %s162
          %s165 = sshll.u32 %s163, 4
          %s166 = int_to_ptr.hbm [resolvable:$true] %s165
          %s167 = sshll.u32 %s157, 4
          %s168 = int_to_ptr.vmem [resolvable:$true] %s167
          %170 = dma.hbm_to_vmem [thread:$0]  %s166, 64, %s168, %s154
        $region28: #{tpu_custom_call.1} parent=23 // pred_fallthru
          _
      $region24: #{tpu_custom_call.1} parent=5 // pred_fallthru
        _
      %p171 = scmp.le.s32.totalorder 1, %s15
      %p172 = scmp.lt.s32.totalorder %s15, 5
      %p173 = pnand %p171, %p172
      %p174 = pneg %p173
      // Predicated region
      $region29: #{tpu_custom_call.1} parent=5 // pred_check
        _
      $region30: #{tpu_custom_call.1} parent=5 // pred_check_branch
        %176 = sbr.rel (%p173) target = $region32
      $region31: #{tpu_custom_call.1} parent=5 // pred_region
        %s177 = ssub.s32 %s15, 1
        %s178 = sand.u32 %s42, 1
        %s179 = scalar_lea.sflag [#allocation3], %s178
        %s180 = sand.u32 %s42, 1
        %s181 = smul.addr %s180, 4
        %s182 = scalar_lea.vmem [#allocation2], %s181
        // Predicated region
        $region33: #{tpu_custom_call.1} parent=31 // pred_check
          %p183 = pneg %p55
        $region34: #{tpu_custom_call.1} parent=31 // pred_check_branch
          %185 = sbr.rel (%p183) target = $region36
        $region35: #{tpu_custom_call.1} parent=31 // pred_region
          %187 = dma.done %s179, 64
        $region36: #{tpu_custom_call.1} parent=31 // pred_fallthru
          _
        %s188 = sand.u32 %s42, 1
        %s189 = scalar_lea.sflag [#allocation3], %s188
        %s190 = sand.u32 %s42, 1
        %s191 = smul.addr %s190, 4
        %s192 = scalar_lea.vmem [#allocation2], %s191
        %p193 = pneg %p55
        %p194 = pneg %p52
        %p195 = pneg %p76
        %p196 = pneg %p73
        %p197 = pneg %p97
        %p198 = pneg %p94
        %p199 = pneg %p125
        %p200 = pneg %p122
        %s201 = sand.u32 %s112, 1
        %s202 = scalar_lea.sflag [#allocation4], %s201
        %s203 = sand.u32 %s112, 1
        %s204 = smul.addr %s203, 4
        %s205 = scalar_lea.vmem [#allocation5], %s204
        %v206 = vld [vmem:[%s182] sm:$0xf]
        %vm207 = vcmask 1043456
        %v208 = vsel %vm207, %v206, 0.0
        %v209 = vrot.slane %v208, 4
        %v210 = vadd.f32 %v208, %v209
        %v211 = vrot.slane %v210, 2
        %v212 = vadd.f32 %v210, %v211
        %v213 = vrot.slane %v212, 1
        %v214 = vadd.f32 %v212, %v213
        %v215 = vmul.f32 %v214, 0.25
        %v216 = vsub.f32 %v206, %v215
        %v217 = vmul.f32 %v216, %v216
        %v218 = vsel %vm207, %v217, 0.0
        %v219 = vrot.slane %v218, 4
        %v220 = vadd.f32 %v218, %v219
        %v221 = vrot.slane %v220, 2
        %v222 = vadd.f32 %v220, %v221
        %v223 = vrot.slane %v222, 1
        %v224 = vadd.f32 %v222, %v223
        %v225 = vmul.f32 %v224, 0.25
        %v226 = vadd.f32 %v225, 1e-06
        %v227 = vrsqrt.pop %v226
        %v228 = vmul.f32 %v227, %v226
        %v229 = vmul.f32 %v228, %v227
        %v230 = vmul.f32 0.5, %v229
        %v231 = vsub.f32 1.5, %v230
        %v232 = vmul.f32 %v227, %v231
        %vm233 = vweird.f32 %v226
        %vm234 = vweird.f32 %v227
        %vm235 = vmor %vm233, %vm234
        %v236 = vsel %vm235, %v227, %v232
        %v237 = vld [vmem:[%s1] sm:$0xf]
        %v238 = vld [vmem:[%s2] sm:$0xf]
        %v239 = vmul.f32 %v216, %v236
        %241 = vset.pattern.permute.xlu0 0
        %242 = vperm.xlu0 %241, %v237
        %v243 = vpop.permute.xlu0 %242
        %v245 = vmul.f32 %v239, %v243
        %247 = vset.pattern.permute.xlu0 0
        %248 = vperm.xlu0 %247, %v238
        %v249 = vpop.permute.xlu0 %248
        %v251 = vadd.f32 %v245, %v249
        %252 = vst [vmem:[%s205] sm:$0xf] %v251
        %s253 = sand.u32 %s112, 1
        %s254 = scalar_lea.sflag [#allocation4], %s253
        %s255 = sand.u32 %s112, 1
        %s256 = smul.addr %s255, 4
        %s257 = scalar_lea.vmem [#allocation5], %s256
        // Predicated region
        $region37: #{tpu_custom_call.1} parent=31 // pred_check
          %p258 = pneg %p122
        $region38: #{tpu_custom_call.1} parent=31 // pred_check_branch
          %260 = sbr.rel (%p258) target = $region40
        $region39: #{tpu_custom_call.1} parent=31 // pred_region
          %262 = vsyncadd %s254, 0
          %s263 = smul.addr %s24, 2
          %s264 = sadd.s32 %s25, %s263
          %s265 = smul.addr %s264, 4
          %s266 = scalar_lea.hbm %s3, %s265
          %s268 = sshll.u32 %s257, 4
          %s269 = int_to_ptr.vmem [resolvable:$true] %s268
          %s270 = sshll.u32 %s266, 4
          %s271 = int_to_ptr.hbm [resolvable:$true] %s270
          %273 = dma.vmem_to_hbm [thread:$0]  %s269, 64, %s271, %s254
        $region40: #{tpu_custom_call.1} parent=31 // pred_fallthru
          _
      $region32: #{tpu_custom_call.1} parent=5 // pred_fallthru
        _
      %p274 = scmp.le.s32.totalorder 2, %s15
      // Predicated region
      $region41: #{tpu_custom_call.1} parent=5 // pred_check
        %p275 = pneg %p274
      $region42: #{tpu_custom_call.1} parent=5 // pred_check_branch
        %277 = sbr.rel (%p275) target = $region44
      $region43: #{tpu_custom_call.1} parent=5 // pred_region
        %s278 = ssub.s32 %s15, 2
        // Predicated region
        $region45: #{tpu_custom_call.1} parent=43 // pred_check
          %p279 = pneg %p128
        $region46: #{tpu_custom_call.1} parent=43 // pred_check_branch
          %281 = sbr.rel (%p279) target = $region48
        $region47: #{tpu_custom_call.1} parent=43 // pred_region
          %s282 = sand.u32 %s113, 1
          %s283 = scalar_lea.sflag [#allocation4], %s282
          %s284 = sand.u32 %s113, 1
          %s285 = smul.addr %s284, 4
          %s286 = scalar_lea.vmem [#allocation5], %s285
          %288 = dma.done %s283, 64
        $region48: #{tpu_custom_call.1} parent=43 // pred_fallthru
          _
      $region44: #{tpu_custom_call.1} parent=5 // pred_fallthru
        _
    $region6: #{tpu_custom_call.1} parent=1 // loop_footer
      %s19 = sadd.s32 1, %s15
    $region7: #{tpu_custom_call.1} parent=1 // loop_footer_branch
      %14 = sbr.rel target = $region3
    $region8: #{tpu_custom_call.1} parent=1 // loop_exit
      _
    %289 = vsyncpa [#allocation3], 1
    %s290 = scalar_lea.sflag [#allocation3], 1
    %291 = vsyncpa %s290, 1
    %292 = vsyncpa [#allocation4], 1
    %s293 = scalar_lea.sflag [#allocation4], 1
    %294 = vsyncpa %s293, 1

</llo_original>
